<compile_context>
chip_gen: v6e
topology: v6e:2x2x1
jax: 0.10.0
libtpu: 0.0.40
codegen_flags: <defaults>
</compile_context>

<pallas_src>
import math

import jax
import jax.numpy as jnp
from jax.experimental import pallas as pl
from jax.experimental.pallas import tpu as pltpu


def _critic_kernel(o_ref, a_ref, w1o_ref, w1a_ref, b1_ref,
                   w2_ref, b2_ref, w3_ref, b3_ref, q_ref):
    """One batch tile of the fused 3-layer critic MLP."""
    # l1: concat fused as a split dot (bf16 MXU inputs, f32 accumulate).
    h1 = (jnp.dot(o_ref[...].astype(jnp.bfloat16), w1o_ref[...],
                  preferred_element_type=jnp.float32)
          + jnp.dot(a_ref[...].astype(jnp.bfloat16), w1a_ref[...],
                    preferred_element_type=jnp.float32)
          + b1_ref[...])
    h1 = jnp.maximum(h1, 0.0)                                  # ReLU (f32, VPU)

    # l2
    h2 = (jnp.dot(h1.astype(jnp.bfloat16), w2_ref[...],
                  preferred_element_type=jnp.float32)
          + b2_ref[...])
    h2 = jnp.maximum(h2, 0.0)                                  # ReLU (f32, VPU)

    # l3: [TB,128] x [128,1]  ->  VPU multiply + XLU lane reduce (skip MXU).
    q = jnp.sum(h2 * w3_ref[...], axis=-1, keepdims=True) + b3_ref[...]
    q_ref[...] = q.astype(q_ref.dtype)


def critic_forward(o, a, params, *, block_batch=128):
    """Fused Pallas critic forward.  o: [B, obs_dim], a: [B, act_dim] -> [B, 1]."""
    w1o, w1a, b1, w2, b2, w3, b3 = params
    B, obs_dim = o.shape
    act_dim = a.shape[1]
    h1_dim = w1o.shape[1]
    h2_dim = w2.shape[1]

    # Batch tile: multiple of 8 (sublane), capped at block_batch; pad the batch
    # (rows are independent) so it divides evenly.
    tb = min(block_batch, max(8, ((B + 7) // 8) * 8))
    b_pad = ((B + tb - 1) // tb) * tb
    if b_pad != B:
        o = jnp.pad(o, ((0, b_pad - B), (0, 0)))
        a = jnp.pad(a, ((0, b_pad - B), (0, 0)))
    nb = b_pad // tb

    def batch_spec(d):
        return pl.BlockSpec((tb, d), lambda i: (i, 0))

    def fixed_spec(shape):
        # Constant block index -> stays resident in VMEM across grid steps.
        return pl.BlockSpec(shape, lambda i: (0, 0))

    q = pl.pallas_call(
        _critic_kernel,
        out_shape=jax.ShapeDtypeStruct((b_pad, 1), jnp.float32),
        grid_spec=pltpu.PrefetchScalarGridSpec(
            num_scalar_prefetch=0,
            grid=(nb,),
            in_specs=[
                batch_spec(obs_dim),             # o   [TB, obs_dim]
                batch_spec(act_dim),             # a   [TB, act_dim]
                fixed_spec((obs_dim, h1_dim)),   # w1[:obs_dim]   (bf16)
                fixed_spec((act_dim, h1_dim)),   # w1[obs_dim:]   (bf16)
                fixed_spec((1, h1_dim)),         # b1  (f32)
                fixed_spec((h1_dim, h2_dim)),    # w2  (bf16)
                fixed_spec((1, h2_dim)),         # b2  (f32)
                fixed_spec((1, h2_dim)),         # w3 row (f32)
                fixed_spec((1, 1)),              # b3  (f32)
            ],
            out_specs=pl.BlockSpec((tb, 1), lambda i: (i, 0)),
        ),
        compiler_params=pltpu.CompilerParams(
            dimension_semantics=("parallel",),   # shard batch tiles across TCs (v7x)
        ),
    )(o, a, w1o, w1a, b1, w2, b2, w3, b3)
    return q[:B]


def init_linear_params(key, in_dim, out_dim):
    """nn.Linear-style init: U(-1/sqrt(fan_in), 1/sqrt(fan_in))."""
    kw, kb = jax.random.split(key)
    bound = 1.0 / math.sqrt(in_dim)
    w = jax.random.uniform(kw, (in_dim, out_dim), jnp.float32, -bound, bound)
    b = jax.random.uniform(kb, (1, out_dim), jnp.float32, -bound, bound)
    return w, b


if __name__ == "__main__":
    # dim_info = [obs_dim, act_dim]; small but grid-exercising shapes.
    batch = 256
    obs_dim, act_dim = 16, 8
    hidden_1, hidden_2 = 128, 128
    obs_act_dim = obs_dim + act_dim

    key = jax.random.PRNGKey(0)
    k_o, k_a, k1, k2, k3 = jax.random.split(key, 5)

    o = jax.random.normal(k_o, (batch, obs_dim), jnp.float32)
    a = jax.random.normal(k_a, (batch, act_dim), jnp.float32)

    w1_f32, b1 = init_linear_params(k1, obs_act_dim, hidden_1)
    w2_f32, b2 = init_linear_params(k2, hidden_1, hidden_2)
    w3_f32, b3 = init_linear_params(k3, hidden_2, 1)

    # Kernel-side parameter storage: split + bf16 weights, f32 biases,
    # final layer kept as an f32 row for the VPU mul+reduce.
    w1o = w1_f32[:obs_dim].astype(jnp.bfloat16)
    w1a = w1_f32[obs_dim:].astype(jnp.bfloat16)
    w2 = w2_f32.astype(jnp.bfloat16)
    w3_row = w3_f32.T                      # [1, hidden_2], f32
    params = (w1o, w1a, b1, w2, b2, w3_row, b3)

    q = critic_forward(o, a, params)
    q = jax.block_until_ready(q)

    # Reference with identical math (same bf16 dot inputs, f32 accumulation).
    ref_h1 = jnp.maximum(
        jnp.dot(o.astype(jnp.bfloat16), w1o, preferred_element_type=jnp.float32)
        + jnp.dot(a.astype(jnp.bfloat16), w1a, preferred_element_type=jnp.float32)
        + b1, 0.0)
    ref_h2 = jnp.maximum(
        jnp.dot(ref_h1.astype(jnp.bfloat16), w2,
                preferred_element_type=jnp.float32) + b2, 0.0)
    ref = jnp.sum(ref_h2 * w3_row, axis=-1, keepdims=True) + b3

    assert q.shape == (batch, 1)
    assert jnp.allclose(q, ref, atol=1e-3, rtol=1e-3), float(
        jnp.max(jnp.abs(q - ref)))

    print("KERNEL_OK")
</pallas_src>

<mosaic_0001>
module attributes {stable_mosaic.version = 11 : i64} {
  func.func @_critic_kernel(%arg0: i32, %arg1: memref<128x16xf32, #tpu.memory_space<vmem>>, %arg2: memref<128x8xf32, #tpu.memory_space<vmem>>, %arg3: memref<16x128xbf16, #tpu.memory_space<vmem>>, %arg4: memref<8x128xbf16, #tpu.memory_space<vmem>>, %arg5: memref<1x128xf32, #tpu.memory_space<vmem>>, %arg6: memref<128x128xbf16, #tpu.memory_space<vmem>>, %arg7: memref<1x128xf32, #tpu.memory_space<vmem>>, %arg8: memref<1x128xf32, #tpu.memory_space<vmem>>, %arg9: memref<1x1xf32, #tpu.memory_space<vmem>>, %arg10: memref<128x1xf32, #tpu.memory_space<vmem>>) attributes {dimension_semantics = [#tpu.dimension_semantics<parallel>], iteration_bounds = array<i64: 2>, scalar_prefetch = 0 : i64, scratch_operands = 0 : i64, tpu.core_type = #tpu.core_type<tc>, window_params = [{transform_indices = @transform_0, window_bounds = array<i64: 128, 16>}, {transform_indices = @transform_1, window_bounds = array<i64: 128, 8>}, {pipeline_mode = #tpu.pipeline_mode<synchronous>, transform_indices = @transform_2, window_bounds = array<i64: 16, 128>}, {pipeline_mode = #tpu.pipeline_mode<synchronous>, transform_indices = @transform_3, window_bounds = array<i64: 8, 128>}, {pipeline_mode = #tpu.pipeline_mode<synchronous>, transform_indices = @transform_4, window_bounds = array<i64: 1, 128>}, {pipeline_mode = #tpu.pipeline_mode<synchronous>, transform_indices = @transform_5, window_bounds = array<i64: 128, 128>}, {pipeline_mode = #tpu.pipeline_mode<synchronous>, transform_indices = @transform_6, window_bounds = array<i64: 1, 128>}, {pipeline_mode = #tpu.pipeline_mode<synchronous>, transform_indices = @transform_7, window_bounds = array<i64: 1, 128>}, {pipeline_mode = #tpu.pipeline_mode<synchronous>, transform_indices = @transform_8, window_bounds = array<i64: 1, 1>}, {transform_indices = @transform_9, window_bounds = array<i64: 128, 1>}]} {
    %c0 = arith.constant 0 : index
    %c0_0 = arith.constant 0 : index
    %0 = vector.load %arg1[%c0, %c0_0] : memref<128x16xf32, #tpu.memory_space<vmem>>, vector<128x16xf32>
    %1 = arith.truncf %0 : vector<128x16xf32> to vector<128x16xbf16>
    %c0_1 = arith.constant 0 : index
    %c0_2 = arith.constant 0 : index
    %2 = vector.load %arg3[%c0_1, %c0_2] : memref<16x128xbf16, #tpu.memory_space<vmem>>, vector<16x128xbf16>
    %cst = arith.constant dense<0.000000e+00> : vector<128x128xf32>
    %3 = tpu.matmul %1, %2, %cst {dimension_numbers = #tpu.dot_dimension_numbers<[1], [0], [0], [1], [0, 0, 1, 1], [], []>} : vector<128x16xbf16>, vector<16x128xbf16>, vector<128x128xf32> -> vector<128x128xf32>
    %c0_3 = arith.constant 0 : index
    %c0_4 = arith.constant 0 : index
    %4 = vector.load %arg2[%c0_3, %c0_4] : memref<128x8xf32, #tpu.memory_space<vmem>>, vector<128x8xf32>
    %5 = arith.truncf %4 : vector<128x8xf32> to vector<128x8xbf16>
    %c0_5 = arith.constant 0 : index
    %c0_6 = arith.constant 0 : index
    %6 = vector.load %arg4[%c0_5, %c0_6] : memref<8x128xbf16, #tpu.memory_space<vmem>>, vector<8x128xbf16>
    %cst_7 = arith.constant dense<0.000000e+00> : vector<128x128xf32>
    %7 = tpu.matmul %5, %6, %cst_7 {dimension_numbers = #tpu.dot_dimension_numbers<[1], [0], [0], [1], [0, 0, 1, 1], [], []>} : vector<128x8xbf16>, vector<8x128xbf16>, vector<128x128xf32> -> vector<128x128xf32>
    %8 = arith.addf %3, %7 : vector<128x128xf32>
    %c0_8 = arith.constant 0 : index
    %c0_9 = arith.constant 0 : index
    %9 = vector.load %arg5[%c0_8, %c0_9] : memref<1x128xf32, #tpu.memory_space<vmem>>, vector<1x128xf32>
    %10 = vector.broadcast %9 : vector<1x128xf32> to vector<128x128xf32>
    %11 = arith.addf %8, %10 : vector<128x128xf32>
    %cst_10 = arith.constant 0.000000e+00 : f32
    %12 = vector.broadcast %cst_10 : f32 to vector<128x128xf32>
    %13 = arith.maximumf %11, %12 : vector<128x128xf32>
    %14 = arith.truncf %13 : vector<128x128xf32> to vector<128x128xbf16>
    %c0_11 = arith.constant 0 : index
    %c0_12 = arith.constant 0 : index
    %15 = vector.load %arg6[%c0_11, %c0_12] : memref<128x128xbf16, #tpu.memory_space<vmem>>, vector<128x128xbf16>
    %cst_13 = arith.constant dense<0.000000e+00> : vector<128x128xf32>
    %16 = tpu.matmul %14, %15, %cst_13 {dimension_numbers = #tpu.dot_dimension_numbers<[1], [0], [0], [1], [0, 0, 1, 1], [], []>} : vector<128x128xbf16>, vector<128x128xbf16>, vector<128x128xf32> -> vector<128x128xf32>
    %c0_14 = arith.constant 0 : index
    %c0_15 = arith.constant 0 : index
    %17 = vector.load %arg7[%c0_14, %c0_15] : memref<1x128xf32, #tpu.memory_space<vmem>>, vector<1x128xf32>
    %18 = vector.broadcast %17 : vector<1x128xf32> to vector<128x128xf32>
    %19 = arith.addf %16, %18 : vector<128x128xf32>
    %cst_16 = arith.constant 0.000000e+00 : f32
    %20 = vector.broadcast %cst_16 : f32 to vector<128x128xf32>
    %21 = arith.maximumf %19, %20 : vector<128x128xf32>
    %c0_17 = arith.constant 0 : index
    %c0_18 = arith.constant 0 : index
    %22 = vector.load %arg8[%c0_17, %c0_18] : memref<1x128xf32, #tpu.memory_space<vmem>>, vector<1x128xf32>
    %23 = vector.broadcast %22 : vector<1x128xf32> to vector<128x128xf32>
    %24 = arith.mulf %21, %23 : vector<128x128xf32>
    %cst_19 = arith.constant dense<0.000000e+00> : vector<128xf32>
    %25 = vector.multi_reduction <add>, %24, %cst_19 [1] : vector<128x128xf32> to vector<128xf32>
    %26 = vector.shape_cast %25 : vector<128xf32> to vector<128x1xf32>
    %c0_20 = arith.constant 0 : index
    %c0_21 = arith.constant 0 : index
    %27 = vector.load %arg9[%c0_20, %c0_21] : memref<1x1xf32, #tpu.memory_space<vmem>>, vector<1x1xf32>
    %28 = vector.broadcast %27 : vector<1x1xf32> to vector<128x1xf32>
    %29 = arith.addf %26, %28 : vector<128x1xf32>
    %c0_22 = arith.constant 0 : index
    %c0_23 = arith.constant 0 : index
    %30 = vector.load %arg10[%c0_22, %c0_23] : memref<128x1xf32, #tpu.memory_space<vmem>>, vector<128x1xf32>
    tpu.vector_store %arg10[%c0_22, %c0_23], %29 {strides = array<i32>} : memref<128x1xf32, #tpu.memory_space<vmem>>, vector<128x1xf32>,
    return
  }
  func.func @transform_0(%arg0: i32) -> (i32, i32) {
    %c0_i32 = arith.constant 0 : i32
    %c0_i32_0 = arith.constant 0 : i32
    return %arg0, %c0_i32 : i32, i32
  }
  func.func @transform_1(%arg0: i32) -> (i32, i32) {
    %c0_i32 = arith.constant 0 : i32
    %c0_i32_0 = arith.constant 0 : i32
    return %arg0, %c0_i32 : i32, i32
  }
  func.func @transform_2(%arg0: i32) -> (i32, i32) {
    %c0_i32 = arith.constant 0 : i32
    %c0_i32_0 = arith.constant 0 : i32
    %c0_i32_1 = arith.constant 0 : i32
    return %c0_i32, %c0_i32_0 : i32, i32
  }
  func.func @transform_3(%arg0: i32) -> (i32, i32) {
    %c0_i32 = arith.constant 0 : i32
    %c0_i32_0 = arith.constant 0 : i32
    %c0_i32_1 = arith.constant 0 : i32
    return %c0_i32, %c0_i32_0 : i32, i32
  }
  func.func @transform_4(%arg0: i32) -> (i32, i32) {
    %c0_i32 = arith.constant 0 : i32
    %c0_i32_0 = arith.constant 0 : i32
    %c0_i32_1 = arith.constant 0 : i32
    return %c0_i32, %c0_i32_0 : i32, i32
  }
  func.func @transform_5(%arg0: i32) -> (i32, i32) {
    %c0_i32 = arith.constant 0 : i32
    %c0_i32_0 = arith.constant 0 : i32
    %c0_i32_1 = arith.constant 0 : i32
    return %c0_i32, %c0_i32_0 : i32, i32
  }
  func.func @transform_6(%arg0: i32) -> (i32, i32) {
    %c0_i32 = arith.constant 0 : i32
    %c0_i32_0 = arith.constant 0 : i32
    %c0_i32_1 = arith.constant 0 : i32
    return %c0_i32, %c0_i32_0 : i32, i32
  }
  func.func @transform_7(%arg0: i32) -> (i32, i32) {
    %c0_i32 = arith.constant 0 : i32
    %c0_i32_0 = arith.constant 0 : i32
    %c0_i32_1 = arith.constant 0 : i32
    return %c0_i32, %c0_i32_0 : i32, i32
  }
  func.func @transform_8(%arg0: i32) -> (i32, i32) {
    %c0_i32 = arith.constant 0 : i32
    %c0_i32_0 = arith.constant 0 : i32
    %c0_i32_1 = arith.constant 0 : i32
    return %c0_i32, %c0_i32_0 : i32, i32
  }
  func.func @transform_9(%arg0: i32) -> (i32, i32) {
    %c0_i32 = arith.constant 0 : i32
    %c0_i32_0 = arith.constant 0 : i32
    return %arg0, %c0_i32 : i32, i32
  }
}

</mosaic_0001>

<llo_original>
// kernel: tpu_custom_call.1
$region0: #{tpu_custom_call.1}
  #allocation0 [shape = 'u32[]', space=smem, size = 0x4, offset = 0x4, fixed_abs, tag = 'smem constant byte address 0x4 - core index']
  #allocation1 [shape = 'u32[144,128]{1,0:T(1,128)}', space=vmem, size = 0x12000, scoped, tag = 'internal scratch']
  #allocation2 [shape = 'f32[1,1]{1,0:T(1,128)S(1)}', space=vmem, size = 0x200, scoped, tag = 'scoped memory for tpu_custom_call.1']
  %s0 = inlined_call_operand.vmem [shape: f32[256,16], index: 0, kind: input, shape index: {}]
  %s1 = inlined_call_operand.vmem [shape: f32[256,8], index: 1, kind: input, shape index: {}]
  %s2 = inlined_call_operand.vmem [shape: bf16[16,128], index: 2, kind: input, shape index: {}]
  %s3 = inlined_call_operand.vmem [shape: bf16[8,128], index: 3, kind: input, shape index: {}]
  %s4 = inlined_call_operand.vmem [shape: f32[1,128], index: 4, kind: input, shape index: {}]
  %s5 = inlined_call_operand.vmem [shape: bf16[128,128], index: 5, kind: input, shape index: {}]
  %s6 = inlined_call_operand.vmem [shape: f32[1,128], index: 6, kind: input, shape index: {}]
  %s7 = inlined_call_operand.vmem [shape: f32[1,128], index: 7, kind: input, shape index: {}]
  %s8 = inlined_call_operand.<no memory space> [shape: f32[1,1], index: 8, kind: input, shape index: {}]
  %s9 = inlined_call_operand.vmem [shape: f32[256,1], index: 9, kind: output, shape index: {}]
  %s10 = sld [smem:[#allocation0]]
  $region69: #{tpu_custom_call.1} parent=0
    _
  %s12 = ssub.s32 1, %s10
  %s13 = scalar_select 0, %s12, %s10
  %v14 = vstv %s8
  %15 = vst [vmem:[#allocation2] sm:$0x1] %v14
  loop: start=0, step=1, limit=4
  $region2: #{tpu_custom_call.1} parent=0 // loop_pre_header
    _
  $region3: #{tpu_custom_call.1} parent=0 // loop_header
    %s17 = sphi 0, %s21
    %p18 = scmp.ge.s32.totalorder %s17, 4
    %s27 = sphi 0, %s29
    %s30 = sphi 0, %s27
    %s31 = sphi 0, %s30
    %s47 = sphi 0, %s31
    %s53 = sphi 0, %s55
    %s56 = sphi 0, %s53
    %s57 = sphi 0, %s56
    %s73 = sphi 0, %s57
    %s77 = sphi 0, %s77
    %s79 = sphi 0, %s77
    %s80 = sphi 0, %s79
    %s94 = sphi 0, %s80
    %s98 = sphi 0, %s98
    %s100 = sphi 0, %s98
    %s101 = sphi 0, %s100
    %s115 = sphi 0, %s101
    %s119 = sphi 0, %s119
    %s121 = sphi 0, %s119
    %s122 = sphi 0, %s121
    %s136 = sphi 0, %s122
    %s140 = sphi 0, %s140
    %s142 = sphi 0, %s140
    %s143 = sphi 0, %s142
    %s157 = sphi 0, %s143
    %s161 = sphi 0, %s161
    %s163 = sphi 0, %s161
    %s164 = sphi 0, %s163
    %s178 = sphi 0, %s164
    %s182 = sphi 0, %s182
    %s184 = sphi 0, %s182
    %s185 = sphi 0, %s184
    %s199 = sphi 0, %s185
    %s203 = sphi 0, %s203
    %s205 = sphi 0, %s203
    %s206 = sphi 0, %s205
    %s220 = sphi 0, %s206
    %s226 = sphi 0, %s228
    %s229 = sphi 0, %s226
    %s230 = sphi 0, %s229
    %s246 = sphi 0, %s230
  $region4: #{tpu_custom_call.1} parent=0 // loop_header_branch
    %20 = sbr.rel (%p18) target = $region8
  $region5: #{tpu_custom_call.1} parent=0 // loop_body
    %s22 = ssub.s32 %s17, 1
    %s23 = ssub.s32 %s17, 2
    %s24 = sadd.s32 %s17, 1
    %s25 = ssub.s32 %s17, %s24
    %p26 = scmp.eq.s32.totalorder %s25, 0
    %s28 = sadd.s32 %s27, 1
    %s29 = scalar_select %p26, %s27, %s28
    %p32 = pneg %p26
    %p33 = scmp.eq.s32.totalorder %s17, 1
    %p34 = por %p32, %p33
    %p35 = scmp.ne.s32.totalorder %s27, %s30
    %p36 = scmp.eq.s32.totalorder %s17, 0
    %p37 = por %p35, %p36
    %p38 = scmp.ne.s32.totalorder %s27, %s30
    %p39 = scmp.eq.s32.totalorder %s22, 1
    %p40 = por %p38, %p39
    %p41 = scmp.ne.s32.totalorder %s30, %s31
    %p42 = scmp.eq.s32.totalorder %s22, 0
    %p43 = por %p41, %p42
    %p44 = scmp.ne.s32.totalorder %s30, %s31
    %p45 = scmp.eq.s32.totalorder %s23, 1
    %p46 = por %p44, %p45
    %p48 = scmp.ne.s32.totalorder %s31, %s47
    %p49 = scmp.eq.s32.totalorder %s23, 0
    %p50 = por %p48, %p49
    %s51 = ssub.s32 %s17, %s24
    %p52 = scmp.eq.s32.totalorder %s51, 0
    %s54 = sadd.s32 %s53, 1
    %s55 = scalar_select %p52, %s53, %s54
    %p58 = pneg %p52
    %p59 = scmp.eq.s32.totalorder %s17, 1
    %p60 = por %p58, %p59
    %p61 = scmp.ne.s32.totalorder %s53, %s56
    %p62 = scmp.eq.s32.totalorder %s17, 0
    %p63 = por %p61, %p62
    %p64 = scmp.ne.s32.totalorder %s53, %s56
    %p65 = scmp.eq.s32.totalorder %s22, 1
    %p66 = por %p64, %p65
    %p67 = scmp.ne.s32.totalorder %s56, %s57
    %p68 = scmp.eq.s32.totalorder %s22, 0
    %p69 = por %p67, %p68
    %p70 = scmp.ne.s32.totalorder %s56, %s57
    %p71 = scmp.eq.s32.totalorder %s23, 1
    %p72 = por %p70, %p71
    %p74 = scmp.ne.s32.totalorder %s57, %s73
    %p75 = scmp.eq.s32.totalorder %s23, 0
    %p76 = por %p74, %p75
    %s78 = sadd.s32 %s77, 1
    %p81 = scmp.eq.s32.totalorder %s17, 1
    %p82 = scmp.ne.s32.totalorder %s77, %s79
    %p83 = scmp.eq.s32.totalorder %s17, 0
    %p84 = por %p82, %p83
    %p85 = scmp.ne.s32.totalorder %s77, %s79
    %p86 = scmp.eq.s32.totalorder %s22, 1
    %p87 = por %p85, %p86
    %p88 = scmp.ne.s32.totalorder %s79, %s80
    %p89 = scmp.eq.s32.totalorder %s22, 0
    %p90 = por %p88, %p89
    %p91 = scmp.ne.s32.totalorder %s79, %s80
    %p92 = scmp.eq.s32.totalorder %s23, 1
    %p93 = por %p91, %p92
    %p95 = scmp.ne.s32.totalorder %s80, %s94
    %p96 = scmp.eq.s32.totalorder %s23, 0
    %p97 = por %p95, %p96
    %s99 = sadd.s32 %s98, 1
    %p102 = scmp.eq.s32.totalorder %s17, 1
    %p103 = scmp.ne.s32.totalorder %s98, %s100
    %p104 = scmp.eq.s32.totalorder %s17, 0
    %p105 = por %p103, %p104
    %p106 = scmp.ne.s32.totalorder %s98, %s100
    %p107 = scmp.eq.s32.totalorder %s22, 1
    %p108 = por %p106, %p107
    %p109 = scmp.ne.s32.totalorder %s100, %s101
    %p110 = scmp.eq.s32.totalorder %s22, 0
    %p111 = por %p109, %p110
    %p112 = scmp.ne.s32.totalorder %s100, %s101
    %p113 = scmp.eq.s32.totalorder %s23, 1
    %p114 = por %p112, %p113
    %p116 = scmp.ne.s32.totalorder %s101, %s115
    %p117 = scmp.eq.s32.totalorder %s23, 0
    %p118 = por %p116, %p117
    %s120 = sadd.s32 %s119, 1
    %p123 = scmp.eq.s32.totalorder %s17, 1
    %p124 = scmp.ne.s32.totalorder %s119, %s121
    %p125 = scmp.eq.s32.totalorder %s17, 0
    %p126 = por %p124, %p125
    %p127 = scmp.ne.s32.totalorder %s119, %s121
    %p128 = scmp.eq.s32.totalorder %s22, 1
    %p129 = por %p127, %p128
    %p130 = scmp.ne.s32.totalorder %s121, %s122
    %p131 = scmp.eq.s32.totalorder %s22, 0
    %p132 = por %p130, %p131
    %p133 = scmp.ne.s32.totalorder %s121, %s122
    %p134 = scmp.eq.s32.totalorder %s23, 1
    %p135 = por %p133, %p134
    %p137 = scmp.ne.s32.totalorder %s122, %s136
    %p138 = scmp.eq.s32.totalorder %s23, 0
    %p139 = por %p137, %p138
    %s141 = sadd.s32 %s140, 1
    %p144 = scmp.eq.s32.totalorder %s17, 1
    %p145 = scmp.ne.s32.totalorder %s140, %s142
    %p146 = scmp.eq.s32.totalorder %s17, 0
    %p147 = por %p145, %p146
    %p148 = scmp.ne.s32.totalorder %s140, %s142
    %p149 = scmp.eq.s32.totalorder %s22, 1
    %p150 = por %p148, %p149
    %p151 = scmp.ne.s32.totalorder %s142, %s143
    %p152 = scmp.eq.s32.totalorder %s22, 0
    %p153 = por %p151, %p152
    %p154 = scmp.ne.s32.totalorder %s142, %s143
    %p155 = scmp.eq.s32.totalorder %s23, 1
    %p156 = por %p154, %p155
    %p158 = scmp.ne.s32.totalorder %s143, %s157
    %p159 = scmp.eq.s32.totalorder %s23, 0
    %p160 = por %p158, %p159
    %s162 = sadd.s32 %s161, 1
    %p165 = scmp.eq.s32.totalorder %s17, 1
    %p166 = scmp.ne.s32.totalorder %s161, %s163
    %p167 = scmp.eq.s32.totalorder %s17, 0
    %p168 = por %p166, %p167
    %p169 = scmp.ne.s32.totalorder %s161, %s163
    %p170 = scmp.eq.s32.totalorder %s22, 1
    %p171 = por %p169, %p170
    %p172 = scmp.ne.s32.totalorder %s163, %s164
    %p173 = scmp.eq.s32.totalorder %s22, 0
    %p174 = por %p172, %p173
    %p175 = scmp.ne.s32.totalorder %s163, %s164
    %p176 = scmp.eq.s32.totalorder %s23, 1
    %p177 = por %p175, %p176
    %p179 = scmp.ne.s32.totalorder %s164, %s178
    %p180 = scmp.eq.s32.totalorder %s23, 0
    %p181 = por %p179, %p180
    %s183 = sadd.s32 %s182, 1
    %p186 = scmp.eq.s32.totalorder %s17, 1
    %p187 = scmp.ne.s32.totalorder %s182, %s184
    %p188 = scmp.eq.s32.totalorder %s17, 0
    %p189 = por %p187, %p188
    %p190 = scmp.ne.s32.totalorder %s182, %s184
    %p191 = scmp.eq.s32.totalorder %s22, 1
    %p192 = por %p190, %p191
    %p193 = scmp.ne.s32.totalorder %s184, %s185
    %p194 = scmp.eq.s32.totalorder %s22, 0
    %p195 = por %p193, %p194
    %p196 = scmp.ne.s32.totalorder %s184, %s185
    %p197 = scmp.eq.s32.totalorder %s23, 1
    %p198 = por %p196, %p197
    %p200 = scmp.ne.s32.totalorder %s185, %s199
    %p201 = scmp.eq.s32.totalorder %s23, 0
    %p202 = por %p200, %p201
    %s204 = sadd.s32 %s203, 1
    %p207 = scmp.eq.s32.totalorder %s17, 1
    %p208 = scmp.ne.s32.totalorder %s203, %s205
    %p209 = scmp.eq.s32.totalorder %s17, 0
    %p210 = por %p208, %p209
    %p211 = scmp.ne.s32.totalorder %s203, %s205
    %p212 = scmp.eq.s32.totalorder %s22, 1
    %p213 = por %p211, %p212
    %p214 = scmp.ne.s32.totalorder %s205, %s206
    %p215 = scmp.eq.s32.totalorder %s22, 0
    %p216 = por %p214, %p215
    %p217 = scmp.ne.s32.totalorder %s205, %s206
    %p218 = scmp.eq.s32.totalorder %s23, 1
    %p219 = por %p217, %p218
    %p221 = scmp.ne.s32.totalorder %s206, %s220
    %p222 = scmp.eq.s32.totalorder %s23, 0
    %p223 = por %p221, %p222
    %s224 = ssub.s32 %s17, %s24
    %p225 = scmp.eq.s32.totalorder %s224, 0
    %s227 = sadd.s32 %s226, 1
    %s228 = scalar_select %p225, %s226, %s227
    %p231 = pneg %p225
    %p232 = scmp.eq.s32.totalorder %s17, 1
    %p233 = por %p231, %p232
    %p234 = scmp.ne.s32.totalorder %s226, %s229
    %p235 = scmp.eq.s32.totalorder %s17, 0
    %p236 = por %p234, %p235
    %p237 = scmp.ne.s32.totalorder %s226, %s229
    %p238 = scmp.eq.s32.totalorder %s22, 1
    %p239 = por %p237, %p238
    %p240 = scmp.ne.s32.totalorder %s229, %s230
    %p241 = scmp.eq.s32.totalorder %s22, 0
    %p242 = por %p240, %p241
    %p243 = scmp.ne.s32.totalorder %s229, %s230
    %p244 = scmp.eq.s32.totalorder %s23, 1
    %p245 = por %p243, %p244
    %p247 = scmp.ne.s32.totalorder %s230, %s246
    %p248 = scmp.eq.s32.totalorder %s23, 0
    %p249 = por %p247, %p248
    %p250 = scmp.le.s32.totalorder 1, %s17
    %p251 = scmp.lt.s32.totalorder %s17, 3
    %p252 = pnand %p250, %p251
    %p253 = pneg %p252
    // Predicated region
    $region9: #{tpu_custom_call.1} parent=5 // pred_check
      _
    $region10: #{tpu_custom_call.1} parent=5 // pred_check_branch
      %255 = sbr.rel (%p252) target = $region12
    $region11: #{tpu_custom_call.1} parent=5 // pred_region
      %s256 = ssub.s32 %s17, 1
      // Predicated region
      $region13: #{tpu_custom_call.1} parent=11 // pred_check
        %p257 = pneg %p90
      $region14: #{tpu_custom_call.1} parent=11 // pred_check_branch
        %259 = sbr.rel (%p257) target = $region16
      $region15: #{tpu_custom_call.1} parent=11 // pred_region
        _
      $region16: #{tpu_custom_call.1} parent=11 // pred_fallthru
        _
      // Predicated region
      $region17: #{tpu_custom_call.1} parent=11 // pred_check
        %p260 = pneg %p111
      $region18: #{tpu_custom_call.1} parent=11 // pred_check_branch
        %262 = sbr.rel (%p260) target = $region20
      $region19: #{tpu_custom_call.1} parent=11 // pred_region
        _
      $region20: #{tpu_custom_call.1} parent=11 // pred_fallthru
        _
      // Predicated region
      $region21: #{tpu_custom_call.1} parent=11 // pred_check
        %p263 = pneg %p132
      $region22: #{tpu_custom_call.1} parent=11 // pred_check_branch
        %265 = sbr.rel (%p263) target = $region24
      $region23: #{tpu_custom_call.1} parent=11 // pred_region
        _
      $region24: #{tpu_custom_call.1} parent=11 // pred_fallthru
        _
      // Predicated region
      $region25: #{tpu_custom_call.1} parent=11 // pred_check
        %p266 = pneg %p153
      $region26: #{tpu_custom_call.1} parent=11 // pred_check_branch
        %268 = sbr.rel (%p266) target = $region28
      $region27: #{tpu_custom_call.1} parent=11 // pred_region
        _
      $region28: #{tpu_custom_call.1} parent=11 // pred_fallthru
        _
      // Predicated region
      $region29: #{tpu_custom_call.1} parent=11 // pred_check
        %p269 = pneg %p174
      $region30: #{tpu_custom_call.1} parent=11 // pred_check_branch
        %271 = sbr.rel (%p269) target = $region32
      $region31: #{tpu_custom_call.1} parent=11 // pred_region
        _
      $region32: #{tpu_custom_call.1} parent=11 // pred_fallthru
        _
      // Predicated region
      $region33: #{tpu_custom_call.1} parent=11 // pred_check
        %p272 = pneg %p195
      $region34: #{tpu_custom_call.1} parent=11 // pred_check_branch
        %274 = sbr.rel (%p272) target = $region36
      $region35: #{tpu_custom_call.1} parent=11 // pred_region
        _
      $region36: #{tpu_custom_call.1} parent=11 // pred_fallthru
        _
      // Predicated region
      $region37: #{tpu_custom_call.1} parent=11 // pred_check
        %p275 = pneg %p216
      $region38: #{tpu_custom_call.1} parent=11 // pred_check_branch
        %277 = sbr.rel (%p275) target = $region40
      $region39: #{tpu_custom_call.1} parent=11 // pred_region
        _
      $region40: #{tpu_custom_call.1} parent=11 // pred_fallthru
        _
    $region12: #{tpu_custom_call.1} parent=5 // pred_fallthru
      _
    %p278 = scmp.lt.s32.totalorder %s17, 2
    // Predicated region
    $region41: #{tpu_custom_call.1} parent=5 // pred_check
      %p279 = pneg %p278
    $region42: #{tpu_custom_call.1} parent=5 // pred_check_branch
      %281 = sbr.rel (%p279) target = $region44
    $region43: #{tpu_custom_call.1} parent=5 // pred_region
      // Predicated region
      $region45: #{tpu_custom_call.1} parent=43 // pred_check
        %p282 = pneg %p37
      $region46: #{tpu_custom_call.1} parent=43 // pred_check_branch
        %284 = sbr.rel (%p282) target = $region48
      $region47: #{tpu_custom_call.1} parent=43 // pred_region
        %s285 = smul.u32 16, %s17
        %p286 = scmp.lt.s32.totalorder %s285, 31
        %s287 = scalar_select %p286, %s285, 31
        %s288 = smul.addr %s287, 8
        %s289 = scalar_lea.vmem %s0, %s288
        %s290 = smul.u32 16, %s17
      $region48: #{tpu_custom_call.1} parent=43 // pred_fallthru
        _
      // Predicated region
      $region49: #{tpu_custom_call.1} parent=43 // pred_check
        %p291 = pneg %p63
      $region50: #{tpu_custom_call.1} parent=43 // pred_check_branch
        %293 = sbr.rel (%p291) target = $region52
      $region51: #{tpu_custom_call.1} parent=43 // pred_region
        %s294 = smul.u32 16, %s17
        %p295 = scmp.lt.s32.totalorder %s294, 31
        %s296 = scalar_select %p295, %s294, 31
        %s297 = smul.addr %s296, 8
        %s298 = scalar_lea.vmem %s1, %s297
        %s299 = smul.u32 16, %s17
      $region52: #{tpu_custom_call.1} parent=43 // pred_fallthru
        _
    $region44: #{tpu_custom_call.1} parent=5 // pred_fallthru
      _
    %p300 = scmp.le.s32.totalorder 1, %s17
    %p301 = scmp.lt.s32.totalorder %s17, 3
    %p302 = pnand %p300, %p301
    %p303 = pneg %p302
    // Predicated region
    $region53: #{tpu_custom_call.1} parent=5 // pred_check
      _
    $region54: #{tpu_custom_call.1} parent=5 // pred_check_branch
      %305 = sbr.rel (%p302) target = $region56
    $region55: #{tpu_custom_call.1} parent=5 // pred_region
      %s306 = ssub.s32 %s17, 1
      %s307 = smul.u32 16, %s22
      %p308 = scmp.lt.s32.totalorder %s307, 31
      %s309 = scalar_select %p308, %s307, 31
      %s310 = smul.addr %s309, 8
      %s311 = scalar_lea.vmem %s0, %s310
      %p312 = pneg %p43
      %p313 = pneg %p40
      %s314 = smul.u32 16, %s22
      %p315 = scmp.lt.s32.totalorder %s314, 31
      %s316 = scalar_select %p315, %s314, 31
      %s317 = smul.addr %s316, 8
      %s318 = scalar_lea.vmem %s1, %s317
      %p319 = pneg %p69
      %p320 = pneg %p66
      %p321 = pneg %p90
      %p322 = pneg %p87
      %p323 = pneg %p111
      %p324 = pneg %p108
      %p325 = pneg %p132
      %p326 = pneg %p129
      %p327 = pneg %p153
      %p328 = pneg %p150
      %p329 = pneg %p174
      %p330 = pneg %p171
      %p331 = pneg %p195
      %p332 = pneg %p192
      %p333 = pneg %p216
      %p334 = pneg %p213
      %p335 = pneg %p242
      %p336 = pneg %p239
      %s337 = smul.u32 16, %s22
      %p338 = scmp.lt.s32.totalorder %s337, 31
      %s339 = scalar_select %p338, %s337, 31
      %s340 = smul.addr %s339, 8
      %s341 = scalar_lea.vmem %s9, %s340
      %s342 = smul.u32 16, %s22
      %p343 = scmp.lt.s32.totalorder %s342, 31
      %s344 = scalar_select %p343, %s342, 31
      %s345 = smul.addr %s344, 8
      %s346 = scalar_lea.vmem %s0, %s345
      %s347 = smul.u32 16, %s22
      %s348 = smul.u32 16, %s22
      %p349 = scmp.lt.s32.totalorder %s348, 31
      %s350 = scalar_select %p349, %s348, 31
      %s351 = smul.addr %s350, 8
      %s352 = scalar_lea.vmem %s1, %s351
      %s353 = smul.u32 16, %s22
      %s354 = smul.u32 16, %s22
      %p355 = scmp.lt.s32.totalorder %s354, 31
      %s356 = scalar_select %p355, %s354, 31
      %s357 = smul.addr %s356, 8
      %s358 = scalar_lea.vmem %s9, %s357
      %s359 = smul.u32 16, %s22
      %v361 = vld [vmem:[%s346] sm:$0xff]
      %v362 = vld [vmem:[%s346 + $0x8] sm:$0xff]
      %v363 = vld [vmem:[%s346 + $0x10] sm:$0xff]
      %v364 = vld [vmem:[%s346 + $0x18] sm:$0xff]
      %v365 = vld [vmem:[%s346 + $0x20] sm:$0xff]
      %v366 = vld [vmem:[%s346 + $0x28] sm:$0xff]
      %v367 = vld [vmem:[%s346 + $0x30] sm:$0xff]
      %v368 = vld [vmem:[%s346 + $0x38] sm:$0xff]
      %v369 = vld [vmem:[%s346 + $0x40] sm:$0xff]
      %v370 = vld [vmem:[%s346 + $0x48] sm:$0xff]
      %v371 = vld [vmem:[%s346 + $0x50] sm:$0xff]
      %v372 = vld [vmem:[%s346 + $0x58] sm:$0xff]
      %v373 = vld [vmem:[%s346 + $0x60] sm:$0xff]
      %v374 = vld [vmem:[%s346 + $0x68] sm:$0xff]
      %v375 = vld [vmem:[%s346 + $0x70] sm:$0xff]
      %v376 = vld [vmem:[%s346 + $0x78] sm:$0xff]
      %v377 = vpack.c.bf16 %v362, %v361
      %v378 = vpack.c.bf16 %v364, %v363
      %v379 = vpack.c.bf16 %v366, %v365
      %v380 = vpack.c.bf16 %v368, %v367
      %v381 = vpack.c.bf16 %v370, %v369
      %v382 = vpack.c.bf16 %v372, %v371
      %v383 = vpack.c.bf16 %v374, %v373
      %v384 = vpack.c.bf16 %v376, %v375
      %v385 = vld [vmem:[%s2] sm:$0xf]
      %v386 = vld [vmem:[%s2 + $0x4] sm:$0xf]
      %v387 = vld [vmem:[%s352] sm:$0xff]
      %v388 = vld [vmem:[%s352 + $0x8] sm:$0xff]
      %v389 = vld [vmem:[%s352 + $0x10] sm:$0xff]
      %v390 = vld [vmem:[%s352 + $0x18] sm:$0xff]
      %v391 = vld [vmem:[%s352 + $0x20] sm:$0xff]
      %v392 = vld [vmem:[%s352 + $0x28] sm:$0xff]
      %v393 = vld [vmem:[%s352 + $0x30] sm:$0xff]
      %v394 = vld [vmem:[%s352 + $0x38] sm:$0xff]
      %v395 = vld [vmem:[%s352 + $0x40] sm:$0xff]
      %v396 = vld [vmem:[%s352 + $0x48] sm:$0xff]
      %v397 = vld [vmem:[%s352 + $0x50] sm:$0xff]
      %v398 = vld [vmem:[%s352 + $0x58] sm:$0xff]
      %v399 = vld [vmem:[%s352 + $0x60] sm:$0xff]
      %v400 = vld [vmem:[%s352 + $0x68] sm:$0xff]
      %v401 = vld [vmem:[%s352 + $0x70] sm:$0xff]
      %v402 = vld [vmem:[%s352 + $0x78] sm:$0xff]
      %v403 = vpack.c.bf16 %v388, %v387
      %v404 = vpack.c.bf16 %v390, %v389
      %v405 = vpack.c.bf16 %v392, %v391
      %v406 = vpack.c.bf16 %v394, %v393
      %v407 = vpack.c.bf16 %v396, %v395
      %v408 = vpack.c.bf16 %v398, %v397
      %v409 = vpack.c.bf16 %v400, %v399
      %v410 = vpack.c.bf16 %v402, %v401
      %v411 = vld [vmem:[%s3] sm:$0xf]
      %vm412 = vcmask 64512
      %v414 = vsel %vm412, %v403, 0
      %v417 = vsel %vm412, %v404, 0
      %v420 = vsel %vm412, %v405, 0
      %v423 = vsel %vm412, %v406, 0
      %v426 = vsel %vm412, %v407, 0
      %v429 = vsel %vm412, %v408, 0
      %v432 = vsel %vm412, %v409, 0
      %v435 = vsel %vm412, %v410, 0
      %vm437 = vcmask 1043456
      %v439 = vsel %vm437, %v411, 0
      %441 = vmatprep.subr.bf16.mxu0 0
      %442 = vmatpush1.bf16.msra.mxu0 0
      %443 = vmatprep.subr.bf16.mxu0 0
      %444 = vmatpush1.bf16.msra.mxu0 0
      %445 = vmatprep.subr.bf16.mxu0 0
      %446 = vmatpush1.bf16.msra.mxu0 0
      %447 = vmatprep.subr.bf16.mxu0 0
      %448 = vmatpush1.bf16.msra.mxu0 0
      %449 = vmatprep.subr.bf16.mxu0 0
      %450 = vmatpush1.bf16.msra.mxu0 0
      %451 = vmatprep.subr.bf16.mxu0 0
      %452 = vmatpush1.bf16.msra.mxu0 0
      %453 = vmatprep.subr.bf16.mxu0 0
      %454 = vmatpush1.bf16.msra.mxu0 0
      %455 = vmatprep.subr.bf16.mxu0 0
      %456 = vmatpush1.bf16.msra.mxu0 %v439
      %457 = vmatprep.subr.bf16.mxu0 0
      %458 = vmatpush2.bf16.msra.mxu0 0
      %459 = vmatprep.subr.bf16.mxu0 0
      %460 = vmatpush2.bf16.msra.mxu0 0
      %461 = vmatprep.subr.bf16.mxu0 0
      %462 = vmatpush2.bf16.msra.mxu0 0
      %463 = vmatprep.subr.bf16.mxu0 0
      %464 = vmatpush2.bf16.msra.mxu0 0
      %465 = vmatprep.subr.bf16.mxu0 0
      %466 = vmatpush2.bf16.msra.mxu0 0
      %467 = vmatprep.subr.bf16.mxu0 0
      %468 = vmatpush2.bf16.msra.mxu0 0
      %469 = vmatprep.subr.bf16.mxu0 0
      %470 = vmatpush2.bf16.msra.mxu0 0
      %471 = vmatprep.subr.bf16.mxu0 0
      %472 = vmatpush2.bf16.msra.mxu0 0
      %473 = vmatprep.mubr.bf16.mxu0 0
      %474 = vmatmul.mubr.bf16.gmra.mxu0 %v414
      %v475 = vpop.f32.mrf.mxu0
      %v476 = vadd.f32 0.0, %v475
      %v477 = vpop.f32.mrf.mxu0
      %v478 = vpop.f32.mrf.mxu0
      %v479 = vadd.f32 0.0, %v478
      %v480 = vpop.f32.mrf.mxu0
      %481 = vmatprep.mubr.bf16.mxu0 0
      %482 = vmatmul.mubr.bf16.gmra.mxu0 %v417
      %v483 = vpop.f32.mrf.mxu0
      %v484 = vadd.f32 0.0, %v483
      %v485 = vpop.f32.mrf.mxu0
      %v486 = vpop.f32.mrf.mxu0
      %v487 = vadd.f32 0.0, %v486
      %v488 = vpop.f32.mrf.mxu0
      %489 = vmatprep.mubr.bf16.mxu0 0
      %490 = vmatmul.mubr.bf16.gmra.mxu0 %v420
      %v491 = vpop.f32.mrf.mxu0
      %v492 = vadd.f32 0.0, %v491
      %v493 = vpop.f32.mrf.mxu0
      %v494 = vpop.f32.mrf.mxu0
      %v495 = vadd.f32 0.0, %v494
      %v496 = vpop.f32.mrf.mxu0
      %497 = vmatprep.mubr.bf16.mxu0 0
      %498 = vmatmul.mubr.bf16.gmra.mxu0 %v423
      %v499 = vpop.f32.mrf.mxu0
      %v500 = vadd.f32 0.0, %v499
      %v501 = vpop.f32.mrf.mxu0
      %v502 = vpop.f32.mrf.mxu0
      %v503 = vadd.f32 0.0, %v502
      %v504 = vpop.f32.mrf.mxu0
      %505 = vmatprep.mubr.bf16.mxu0 0
      %506 = vmatmul.mubr.bf16.gmra.mxu0 %v426
      %v507 = vpop.f32.mrf.mxu0
      %v508 = vadd.f32 0.0, %v507
      %v509 = vpop.f32.mrf.mxu0
      %v510 = vpop.f32.mrf.mxu0
      %v511 = vadd.f32 0.0, %v510
      %v512 = vpop.f32.mrf.mxu0
      %513 = vmatprep.mubr.bf16.mxu0 0
      %514 = vmatmul.mubr.bf16.gmra.mxu0 %v429
      %v515 = vpop.f32.mrf.mxu0
      %v516 = vadd.f32 0.0, %v515
      %v517 = vpop.f32.mrf.mxu0
      %v518 = vpop.f32.mrf.mxu0
      %v519 = vadd.f32 0.0, %v518
      %v520 = vpop.f32.mrf.mxu0
      %521 = vmatprep.mubr.bf16.mxu0 0
      %522 = vmatmul.mubr.bf16.gmra.mxu0 %v432
      %v523 = vpop.f32.mrf.mxu0
      %v524 = vadd.f32 0.0, %v523
      %v525 = vpop.f32.mrf.mxu0
      %v526 = vpop.f32.mrf.mxu0
      %v527 = vadd.f32 0.0, %v526
      %v528 = vpop.f32.mrf.mxu0
      %529 = vmatprep.mubr.bf16.mxu0 0
      %530 = vmatmul.mubr.bf16.gmra.mxu0 %v435
      %v531 = vpop.f32.mrf.mxu0
      %v532 = vadd.f32 0.0, %v531
      %v533 = vpop.f32.mrf.mxu0
      %v534 = vpop.f32.mrf.mxu0
      %v535 = vadd.f32 0.0, %v534
      %v536 = vpop.f32.mrf.mxu0
      %537 = vdwg.mxu0
      %v540 = vunpack.c.l.b16 %v385
      %v541 = vunpack.c.l.b16 %v386
      %v542 = vpack.c.b16 %v541, %v540
      %vm544 = vcmask 130048
      %v546 = vsel %vm544, %v377, 0
      %v549 = vsel %vm544, %v378, 0
      %v552 = vsel %vm544, %v379, 0
      %v555 = vsel %vm544, %v380, 0
      %v558 = vsel %vm544, %v381, 0
      %v561 = vsel %vm544, %v382, 0
      %v564 = vsel %vm544, %v383, 0
      %v567 = vsel %vm544, %v384, 0
      %569 = vmatprep.subr.bf16.mxu0 0
      %570 = vmatpush1.bf16.msra.mxu0 0
      %571 = vmatprep.subr.bf16.mxu0 0
      %572 = vmatpush1.bf16.msra.mxu0 0
      %573 = vmatprep.subr.bf16.mxu0 0
      %574 = vmatpush1.bf16.msra.mxu0 0
      %575 = vmatprep.subr.bf16.mxu0 0
      %576 = vmatpush1.bf16.msra.mxu0 0
      %577 = vmatprep.subr.bf16.mxu0 0
      %578 = vmatpush1.bf16.msra.mxu0 0
      %579 = vmatprep.subr.bf16.mxu0 0
      %580 = vmatpush1.bf16.msra.mxu0 0
      %581 = vmatprep.subr.bf16.mxu0 0
      %582 = vmatpush1.bf16.msra.mxu0 0
      %583 = vmatprep.subr.bf16.mxu0 0
      %584 = vmatpush1.bf16.msra.mxu0 %v542
      %585 = vmatprep.subr.bf16.mxu0 0
      %586 = vmatpush2.bf16.msra.mxu0 0
      %587 = vmatprep.subr.bf16.mxu0 0
      %588 = vmatpush2.bf16.msra.mxu0 0
      %589 = vmatprep.subr.bf16.mxu0 0
      %590 = vmatpush2.bf16.msra.mxu0 0
      %591 = vmatprep.subr.bf16.mxu0 0
      %592 = vmatpush2.bf16.msra.mxu0 0
      %593 = vmatprep.subr.bf16.mxu0 0
      %594 = vmatpush2.bf16.msra.mxu0 0
      %595 = vmatprep.subr.bf16.mxu0 0
      %596 = vmatpush2.bf16.msra.mxu0 0
      %597 = vmatprep.subr.bf16.mxu0 0
      %598 = vmatpush2.bf16.msra.mxu0 0
      %599 = vmatprep.subr.bf16.mxu0 0
      %600 = vmatpush2.bf16.msra.mxu0 0
      %601 = vmatprep.mubr.bf16.mxu0 0
      %602 = vmatmul.mubr.bf16.gmra.mxu0 %v546
      %v603 = vpop.f32.mrf.mxu0
      %v604 = vadd.f32 %v476, %v603
      %v605 = vpop.f32.mrf.mxu0
      %v606 = vpop.f32.mrf.mxu0
      %v607 = vadd.f32 %v479, %v606
      %v608 = vpop.f32.mrf.mxu0
      %609 = vmatprep.mubr.bf16.mxu0 0
      %610 = vmatmul.mubr.bf16.gmra.mxu0 %v549
      %v611 = vpop.f32.mrf.mxu0
      %v612 = vadd.f32 %v484, %v611
      %v613 = vpop.f32.mrf.mxu0
      %v614 = vpop.f32.mrf.mxu0
      %v615 = vadd.f32 %v487, %v614
      %v616 = vpop.f32.mrf.mxu0
      %617 = vmatprep.mubr.bf16.mxu0 0
      %618 = vmatmul.mubr.bf16.gmra.mxu0 %v552
      %v619 = vpop.f32.mrf.mxu0
      %v620 = vadd.f32 %v492, %v619
      %v621 = vpop.f32.mrf.mxu0
      %v622 = vpop.f32.mrf.mxu0
      %v623 = vadd.f32 %v495, %v622
      %v624 = vpop.f32.mrf.mxu0
      %625 = vmatprep.mubr.bf16.mxu0 0
      %626 = vmatmul.mubr.bf16.gmra.mxu0 %v555
      %v627 = vpop.f32.mrf.mxu0
      %v628 = vadd.f32 %v500, %v627
      %v629 = vpop.f32.mrf.mxu0
      %v630 = vpop.f32.mrf.mxu0
      %v631 = vadd.f32 %v503, %v630
      %v632 = vpop.f32.mrf.mxu0
      %633 = vmatprep.mubr.bf16.mxu0 0
      %634 = vmatmul.mubr.bf16.gmra.mxu0 %v558
      %v635 = vpop.f32.mrf.mxu0
      %v636 = vadd.f32 %v508, %v635
      %v637 = vpop.f32.mrf.mxu0
      %v638 = vpop.f32.mrf.mxu0
      %v639 = vadd.f32 %v511, %v638
      %v640 = vpop.f32.mrf.mxu0
      %641 = vmatprep.mubr.bf16.mxu0 0
      %642 = vmatmul.mubr.bf16.gmra.mxu0 %v561
      %v643 = vpop.f32.mrf.mxu0
      %v644 = vadd.f32 %v516, %v643
      %v645 = vpop.f32.mrf.mxu0
      %v646 = vpop.f32.mrf.mxu0
      %v647 = vadd.f32 %v519, %v646
      %v648 = vpop.f32.mrf.mxu0
      %649 = vmatprep.mubr.bf16.mxu0 0
      %650 = vmatmul.mubr.bf16.gmra.mxu0 %v564
      %v651 = vpop.f32.mrf.mxu0
      %v652 = vadd.f32 %v524, %v651
      %v653 = vpop.f32.mrf.mxu0
      %v654 = vpop.f32.mrf.mxu0
      %v655 = vadd.f32 %v527, %v654
      %v656 = vpop.f32.mrf.mxu0
      %657 = vmatprep.mubr.bf16.mxu0 0
      %658 = vmatmul.mubr.bf16.gmra.mxu0 %v567
      %v659 = vpop.f32.mrf.mxu0
      %v660 = vadd.f32 %v532, %v659
      %v661 = vpop.f32.mrf.mxu0
      %v662 = vpop.f32.mrf.mxu0
      %v663 = vadd.f32 %v535, %v662
      %v664 = vpop.f32.mrf.mxu0
      %665 = vdwg.mxu0
      %v666 = vld [vmem:[%s4] sm:$0x1]
      %v668 = vlaneseq
      %v669 = vshrl.u32 %v668, 7
      %v670 = vsub.s32 0, %v669
      %v671 = vrot.slane %v666, %v670
      %v673 = vadd.f32 %v604, %v671
      %v674 = vadd.f32 %v607, %v671
      %v675 = vadd.f32 %v612, %v671
      %v676 = vadd.f32 %v615, %v671
      %v677 = vadd.f32 %v620, %v671
      %v678 = vadd.f32 %v623, %v671
      %v679 = vadd.f32 %v628, %v671
      %v680 = vadd.f32 %v631, %v671
      %v681 = vadd.f32 %v636, %v671
      %v682 = vadd.f32 %v639, %v671
      %v683 = vadd.f32 %v644, %v671
      %v684 = vadd.f32 %v647, %v671
      %v685 = vadd.f32 %v652, %v671
      %v686 = vadd.f32 %v655, %v671
      %v687 = vadd.f32 %v660, %v671
      %v688 = vadd.f32 %v663, %v671
      %v689 = vmax.f32 %v673, 0.0
      %v690 = vmax.f32 %v674, 0.0
      %v691 = vmax.f32 %v675, 0.0
      %v692 = vmax.f32 %v676, 0.0
      %v693 = vmax.f32 %v677, 0.0
      %v694 = vmax.f32 %v678, 0.0
      %v695 = vmax.f32 %v679, 0.0
      %v696 = vmax.f32 %v680, 0.0
      %v697 = vmax.f32 %v681, 0.0
      %v698 = vmax.f32 %v682, 0.0
      %v699 = vmax.f32 %v683, 0.0
      %v700 = vmax.f32 %v684, 0.0
      %v701 = vmax.f32 %v685, 0.0
      %v702 = vmax.f32 %v686, 0.0
      %v703 = vmax.f32 %v687, 0.0
      %v704 = vmax.f32 %v688, 0.0
      %v705 = vpack.c.bf16 %v690, %v689
      %v706 = vpack.c.bf16 %v692, %v691
      %v707 = vpack.c.bf16 %v694, %v693
      %v708 = vpack.c.bf16 %v696, %v695
      %v709 = vpack.c.bf16 %v698, %v697
      %v710 = vpack.c.bf16 %v700, %v699
      %v711 = vpack.c.bf16 %v702, %v701
      %v712 = vpack.c.bf16 %v704, %v703
      %v713 = vld [vmem:[%s5] sm:$0xf]
      %v714 = vld [vmem:[%s5 + $0x4] sm:$0xf]
      %v715 = vld [vmem:[%s5 + $0x8] sm:$0xf]
      %v716 = vld [vmem:[%s5 + $0xc] sm:$0xf]
      %v717 = vld [vmem:[%s5 + $0x10] sm:$0xf]
      %v718 = vld [vmem:[%s5 + $0x14] sm:$0xf]
      %v719 = vld [vmem:[%s5 + $0x18] sm:$0xf]
      %v720 = vld [vmem:[%s5 + $0x1c] sm:$0xf]
      %v721 = vld [vmem:[%s5 + $0x20] sm:$0xf]
      %v722 = vld [vmem:[%s5 + $0x24] sm:$0xf]
      %v723 = vld [vmem:[%s5 + $0x28] sm:$0xf]
      %v724 = vld [vmem:[%s5 + $0x2c] sm:$0xf]
      %v725 = vld [vmem:[%s5 + $0x30] sm:$0xf]
      %v726 = vld [vmem:[%s5 + $0x34] sm:$0xf]
      %v727 = vld [vmem:[%s5 + $0x38] sm:$0xf]
      %v728 = vld [vmem:[%s5 + $0x3c] sm:$0xf]
      %v729 = vld [vmem:[%s6] sm:$0x1]
      %v731 = vlaneseq
      %v732 = vshrl.u32 %v731, 7
      %v733 = vsub.s32 0, %v732
      %v734 = vrot.slane %v729, %v733
      %v752 = vunpack.c.l.b16 %v713
      %v753 = vunpack.c.l.b16 %v714
      %v754 = vunpack.c.l.b16 %v715
      %v755 = vunpack.c.l.b16 %v716
      %v756 = vunpack.c.l.b16 %v717
      %v757 = vunpack.c.l.b16 %v718
      %v758 = vunpack.c.l.b16 %v719
      %v759 = vunpack.c.l.b16 %v720
      %v760 = vunpack.c.l.b16 %v721
      %v761 = vunpack.c.l.b16 %v722
      %v762 = vunpack.c.l.b16 %v723
      %v763 = vunpack.c.l.b16 %v724
      %v764 = vunpack.c.l.b16 %v725
      %v765 = vunpack.c.l.b16 %v726
      %v766 = vunpack.c.l.b16 %v727
      %v767 = vunpack.c.l.b16 %v728
      %v768 = vpack.c.b16 %v753, %v752
      %v769 = vpack.c.b16 %v755, %v754
      %v770 = vpack.c.b16 %v757, %v756
      %v771 = vpack.c.b16 %v759, %v758
      %v772 = vpack.c.b16 %v761, %v760
      %v773 = vpack.c.b16 %v763, %v762
      %v774 = vpack.c.b16 %v765, %v764
      %v775 = vpack.c.b16 %v767, %v766
      %784 = vmatprep.subr.bf16.mxu0 0
      %785 = vmatpush1.bf16.msra.mxu0 %v775
      %786 = vmatprep.subr.bf16.mxu0 0
      %787 = vmatpush1.bf16.msra.mxu0 %v774
      %788 = vmatprep.subr.bf16.mxu0 0
      %789 = vmatpush1.bf16.msra.mxu0 %v773
      %790 = vmatprep.subr.bf16.mxu0 0
      %791 = vmatpush1.bf16.msra.mxu0 %v772
      %792 = vmatprep.subr.bf16.mxu0 0
      %793 = vmatpush1.bf16.msra.mxu0 %v771
      %794 = vmatprep.subr.bf16.mxu0 0
      %795 = vmatpush1.bf16.msra.mxu0 %v770
      %796 = vmatprep.subr.bf16.mxu0 0
      %797 = vmatpush1.bf16.msra.mxu0 %v769
      %798 = vmatprep.subr.bf16.mxu0 0
      %799 = vmatpush1.bf16.msra.mxu0 %v768
      %800 = vmatprep.subr.bf16.mxu0 0
      %801 = vmatpush2.bf16.msra.mxu0 0
      %802 = vmatprep.subr.bf16.mxu0 0
      %803 = vmatpush2.bf16.msra.mxu0 0
      %804 = vmatprep.subr.bf16.mxu0 0
      %805 = vmatpush2.bf16.msra.mxu0 0
      %806 = vmatprep.subr.bf16.mxu0 0
      %807 = vmatpush2.bf16.msra.mxu0 0
      %808 = vmatprep.subr.bf16.mxu0 0
      %809 = vmatpush2.bf16.msra.mxu0 0
      %810 = vmatprep.subr.bf16.mxu0 0
      %811 = vmatpush2.bf16.msra.mxu0 0
      %812 = vmatprep.subr.bf16.mxu0 0
      %813 = vmatpush2.bf16.msra.mxu0 0
      %814 = vmatprep.subr.bf16.mxu0 0
      %815 = vmatpush2.bf16.msra.mxu0 0
      %816 = vmatprep.mubr.bf16.mxu0 0
      %817 = vmatmul.mubr.bf16.gmra.mxu0 %v705
      %v818 = vpop.f32.mrf.mxu0
      %v819 = vadd.f32 %v734, %v818
      %v820 = vpop.f32.mrf.mxu0
      %v821 = vpop.f32.mrf.mxu0
      %v822 = vadd.f32 %v734, %v821
      %v823 = vpop.f32.mrf.mxu0
      %824 = vmatprep.mubr.bf16.mxu0 0
      %825 = vmatmul.mubr.bf16.gmra.mxu0 %v706
      %v826 = vpop.f32.mrf.mxu0
      %v827 = vadd.f32 %v734, %v826
      %v828 = vpop.f32.mrf.mxu0
      %v829 = vpop.f32.mrf.mxu0
      %v830 = vadd.f32 %v734, %v829
      %v831 = vpop.f32.mrf.mxu0
      %832 = vmatprep.mubr.bf16.mxu0 0
      %833 = vmatmul.mubr.bf16.gmra.mxu0 %v707
      %v834 = vpop.f32.mrf.mxu0
      %v835 = vadd.f32 %v734, %v834
      %v836 = vpop.f32.mrf.mxu0
      %v837 = vpop.f32.mrf.mxu0
      %v838 = vadd.f32 %v734, %v837
      %v839 = vpop.f32.mrf.mxu0
      %840 = vmatprep.mubr.bf16.mxu0 0
      %841 = vmatmul.mubr.bf16.gmra.mxu0 %v708
      %v842 = vpop.f32.mrf.mxu0
      %v843 = vadd.f32 %v734, %v842
      %v844 = vpop.f32.mrf.mxu0
      %v845 = vpop.f32.mrf.mxu0
      %v846 = vadd.f32 %v734, %v845
      %v847 = vpop.f32.mrf.mxu0
      %848 = vmatprep.mubr.bf16.mxu0 0
      %849 = vmatmul.mubr.bf16.gmra.mxu0 %v709
      %v850 = vpop.f32.mrf.mxu0
      %v851 = vadd.f32 %v734, %v850
      %v852 = vpop.f32.mrf.mxu0
      %v853 = vpop.f32.mrf.mxu0
      %v854 = vadd.f32 %v734, %v853
      %v855 = vpop.f32.mrf.mxu0
      %856 = vmatprep.mubr.bf16.mxu0 0
      %857 = vmatmul.mubr.bf16.gmra.mxu0 %v710
      %v858 = vpop.f32.mrf.mxu0
      %v859 = vadd.f32 %v734, %v858
      %v860 = vpop.f32.mrf.mxu0
      %v861 = vpop.f32.mrf.mxu0
      %v862 = vadd.f32 %v734, %v861
      %v863 = vpop.f32.mrf.mxu0
      %864 = vmatprep.mubr.bf16.mxu0 0
      %865 = vmatmul.mubr.bf16.gmra.mxu0 %v711
      %v866 = vpop.f32.mrf.mxu0
      %v867 = vadd.f32 %v734, %v866
      %v868 = vpop.f32.mrf.mxu0
      %v869 = vpop.f32.mrf.mxu0
      %v870 = vadd.f32 %v734, %v869
      %v871 = vpop.f32.mrf.mxu0
      %872 = vmatprep.mubr.bf16.mxu0 0
      %873 = vmatmul.mubr.bf16.gmra.mxu0 %v712
      %v874 = vpop.f32.mrf.mxu0
      %v875 = vadd.f32 %v734, %v874
      %v876 = vpop.f32.mrf.mxu0
      %v877 = vpop.f32.mrf.mxu0
      %v878 = vadd.f32 %v734, %v877
      %v879 = vpop.f32.mrf.mxu0
      %880 = vdwg.mxu0
      %v881 = vmax.f32 %v819, 0.0
      %v882 = vmax.f32 %v822, 0.0
      %v883 = vmax.f32 %v827, 0.0
      %v884 = vmax.f32 %v830, 0.0
      %v885 = vmax.f32 %v835, 0.0
      %v886 = vmax.f32 %v838, 0.0
      %v887 = vmax.f32 %v843, 0.0
      %v888 = vmax.f32 %v846, 0.0
      %v889 = vmax.f32 %v851, 0.0
      %v890 = vmax.f32 %v854, 0.0
      %v891 = vmax.f32 %v859, 0.0
      %v892 = vmax.f32 %v862, 0.0
      %v893 = vmax.f32 %v867, 0.0
      %v894 = vmax.f32 %v870, 0.0
      %v895 = vmax.f32 %v875, 0.0
      %v896 = vmax.f32 %v878, 0.0
      %v897 = vld [vmem:[%s7] sm:$0x1]
      %v899 = vlaneseq
      %v900 = vshrl.u32 %v899, 7
      %v901 = vsub.s32 0, %v900
      %v902 = vrot.slane %v897, %v901
      %v904 = vmul.f32 %v881, %v902
      %v905 = vmul.f32 %v882, %v902
      %v906 = vmul.f32 %v883, %v902
      %v907 = vmul.f32 %v884, %v902
      %v908 = vmul.f32 %v885, %v902
      %v909 = vmul.f32 %v886, %v902
      %v910 = vmul.f32 %v887, %v902
      %v911 = vmul.f32 %v888, %v902
      %v912 = vmul.f32 %v889, %v902
      %v913 = vmul.f32 %v890, %v902
      %v914 = vmul.f32 %v891, %v902
      %v915 = vmul.f32 %v892, %v902
      %v916 = vmul.f32 %v893, %v902
      %v917 = vmul.f32 %v894, %v902
      %v918 = vmul.f32 %v895, %v902
      %v919 = vmul.f32 %v896, %v902
      %920 = vadd.xlane.f32.xlu0 %v904
      %v921 = vpop.xlane.xlu0 %920
      %922 = vadd.xlane.f32.xlu0 %v905
      %v923 = vpop.xlane.xlu0 %922
      %924 = vadd.xlane.f32.xlu0 %v906
      %v925 = vpop.xlane.xlu0 %924
      %926 = vadd.xlane.f32.xlu0 %v907
      %v927 = vpop.xlane.xlu0 %926
      %928 = vadd.xlane.f32.xlu0 %v908
      %v929 = vpop.xlane.xlu0 %928
      %930 = vadd.xlane.f32.xlu0 %v909
      %v931 = vpop.xlane.xlu0 %930
      %932 = vadd.xlane.f32.xlu0 %v910
      %v933 = vpop.xlane.xlu0 %932
      %934 = vadd.xlane.f32.xlu0 %v911
      %v935 = vpop.xlane.xlu0 %934
      %936 = vadd.xlane.f32.xlu0 %v912
      %v937 = vpop.xlane.xlu0 %936
      %938 = vadd.xlane.f32.xlu0 %v913
      %v939 = vpop.xlane.xlu0 %938
      %940 = vadd.xlane.f32.xlu0 %v914
      %v941 = vpop.xlane.xlu0 %940
      %942 = vadd.xlane.f32.xlu0 %v915
      %v943 = vpop.xlane.xlu0 %942
      %944 = vadd.xlane.f32.xlu0 %v916
      %v945 = vpop.xlane.xlu0 %944
      %946 = vadd.xlane.f32.xlu0 %v917
      %v947 = vpop.xlane.xlu0 %946
      %948 = vadd.xlane.f32.xlu0 %v918
      %v949 = vpop.xlane.xlu0 %948
      %950 = vadd.xlane.f32.xlu0 %v919
      %v951 = vpop.xlane.xlu0 %950
      %v952 = vld [vmem:[#allocation2] sm:$0x1]
      %v954 = vlaneseq
      %v955 = vshrl.u32 %v954, 7
      %v956 = vsub.s32 0, %v955
      %v957 = vrot.slane %v952, %v956
      %v959 = vadd.f32 %v921, %v957
      %v960 = vadd.f32 %v923, %v957
      %v961 = vadd.f32 %v925, %v957
      %v962 = vadd.f32 %v927, %v957
      %v963 = vadd.f32 %v929, %v957
      %v964 = vadd.f32 %v931, %v957
      %v965 = vadd.f32 %v933, %v957
      %v966 = vadd.f32 %v935, %v957
      %v967 = vadd.f32 %v937, %v957
      %v968 = vadd.f32 %v939, %v957
      %v969 = vadd.f32 %v941, %v957
      %v970 = vadd.f32 %v943, %v957
      %v971 = vadd.f32 %v945, %v957
      %v972 = vadd.f32 %v947, %v957
      %v973 = vadd.f32 %v949, %v957
      %v974 = vadd.f32 %v951, %v957
      %vm975 = vcmask 7168
      %976 = vst.msk [vmem:[%s358] sm:$0xff] %vm975, %v959
      %977 = vst.msk [vmem:[%s358 + $0x8] sm:$0xff] %vm975, %v960
      %978 = vst.msk [vmem:[%s358 + $0x10] sm:$0xff] %vm975, %v961
      %979 = vst.msk [vmem:[%s358 + $0x18] sm:$0xff] %vm975, %v962
      %980 = vst.msk [vmem:[%s358 + $0x20] sm:$0xff] %vm975, %v963
      %981 = vst.msk [vmem:[%s358 + $0x28] sm:$0xff] %vm975, %v964
      %982 = vst.msk [vmem:[%s358 + $0x30] sm:$0xff] %vm975, %v965
      %983 = vst.msk [vmem:[%s358 + $0x38] sm:$0xff] %vm975, %v966
      %984 = vst.msk [vmem:[%s358 + $0x40] sm:$0xff] %vm975, %v967
      %985 = vst.msk [vmem:[%s358 + $0x48] sm:$0xff] %vm975, %v968
      %986 = vst.msk [vmem:[%s358 + $0x50] sm:$0xff] %vm975, %v969
      %987 = vst.msk [vmem:[%s358 + $0x58] sm:$0xff] %vm975, %v970
      %988 = vst.msk [vmem:[%s358 + $0x60] sm:$0xff] %vm975, %v971
      %989 = vst.msk [vmem:[%s358 + $0x68] sm:$0xff] %vm975, %v972
      %990 = vst.msk [vmem:[%s358 + $0x70] sm:$0xff] %vm975, %v973
      %991 = vst.msk [vmem:[%s358 + $0x78] sm:$0xff] %vm975, %v974
      %s992 = smul.u32 16, %s22
      %p993 = scmp.lt.s32.totalorder %s992, 31
      %s994 = scalar_select %p993, %s992, 31
      %s995 = smul.addr %s994, 8
      %s996 = scalar_lea.vmem %s9, %s995
      // Predicated region
      $region57: #{tpu_custom_call.1} parent=55 // pred_check
        %p997 = pneg %p239
      $region58: #{tpu_custom_call.1} parent=55 // pred_check_branch
        %999 = sbr.rel (%p997) target = $region60
      $region59: #{tpu_custom_call.1} parent=55 // pred_region
        %s1000 = smul.u32 16, %s22
      $region60: #{tpu_custom_call.1} parent=55 // pred_fallthru
        _
    $region56: #{tpu_custom_call.1} parent=5 // pred_fallthru
      _
    %p1001 = scmp.le.s32.totalorder 2, %s17
    // Predicated region
    $region61: #{tpu_custom_call.1} parent=5 // pred_check
      %p1002 = pneg %p1001
    $region62: #{tpu_custom_call.1} parent=5 // pred_check_branch
      %1004 = sbr.rel (%p1002) target = $region64
    $region63: #{tpu_custom_call.1} parent=5 // pred_region
      %s1005 = ssub.s32 %s17, 2
      // Predicated region
      $region65: #{tpu_custom_call.1} parent=63 // pred_check
        %p1006 = pneg %p245
      $region66: #{tpu_custom_call.1} parent=63 // pred_check_branch
        %1008 = sbr.rel (%p1006) target = $region68
      $region67: #{tpu_custom_call.1} parent=63 // pred_region
        %s1009 = smul.u32 16, %s23
        %p1010 = scmp.lt.s32.totalorder %s1009, 31
        %s1011 = scalar_select %p1010, %s1009, 31
        %s1012 = smul.addr %s1011, 8
        %s1013 = scalar_lea.vmem %s9, %s1012
      $region68: #{tpu_custom_call.1} parent=63 // pred_fallthru
        _
    $region64: #{tpu_custom_call.1} parent=5 // pred_fallthru
      _
  $region6: #{tpu_custom_call.1} parent=0 // loop_footer
    %s21 = sadd.s32 1, %s17
  $region7: #{tpu_custom_call.1} parent=0 // loop_footer_branch
    %16 = sbr.rel target = $region3
  $region8: #{tpu_custom_call.1} parent=0 // loop_exit
    _

</llo_original>
